<compile_context>
chip_gen: v7x
topology: tpu7x:2x2x1
jax: 0.10.0
libtpu: 0.0.40
codegen_flags: <defaults>
</compile_context>

<pallas_src>
import functools

import jax
import jax.numpy as jnp
from jax.experimental import pallas as pl
from jax.experimental.pallas import tpu as pltpu

_LANE = 128


def _round_up(x, m):
    return ((x + m - 1) // m) * m


def _tpu_defaults():
    """(default batch tile, scoped VMEM limit) sized per chip generation."""
    try:
        vmem = pltpu.get_tpu_info().vmem_capacity_bytes
    except Exception:  # no TPU info available -> conservative defaults
        vmem = 64 << 20
    if vmem >= (100 << 20):          # v5e / v6e: 128 MiB physical VMEM
        return 8192, 64 << 20
    return 4096, 32 << 20            # v7x (64 MiB physical) and unknown chips


_DEFAULT_BLOCK_BATCH, _VMEM_LIMIT_BYTES = _tpu_defaults()


def _pick_batch_tile(B, block_batch, vmem_budget_bytes, padded_row_bytes):
    """Largest tile that fits the lane-padded, double-buffered VMEM budget."""
    cap = max(16, vmem_budget_bytes // max(padded_row_bytes, 1))
    tb = min(block_batch, cap)
    if B >= 32:
        # >= 2 grid steps so v7x megacore sharding has work for both cores.
        tb = min(tb, _round_up(pl.cdiv(B, 2), 16))
    tb = min(tb, _round_up(B, 8))
    if tb >= 16:
        tb = (tb // 16) * 16         # bf16 sublane-pair alignment
    else:
        tb = 8
    return tb


def _qfunc_kernel(obs_ref, act_ref,
                  w1o_ref, w1a_ref, b1_ref,
                  w2_ref, b2_ref,
                  w3_ref, b3_ref,
                  o_ref):
    cd = w1o_ref.dtype                       # MXU compute dtype (bf16)
    obs = obs_ref[...].astype(cd)            # in-kernel cast: no wrapper HBM pass
    act = act_ref[...].astype(cd)

    # Layer 1: concat([obs, act]) @ W1 + b1, ReLU.  Concat folded into two
    # matmuls against the row-split W1 (no concatenated buffer materializes).
    h = jnp.dot(obs, w1o_ref[...], preferred_element_type=jnp.float32)
    h = h + jnp.dot(act, w1a_ref[...], preferred_element_type=jnp.float32)
    h = jnp.maximum(h + b1_ref[...], 0.0).astype(cd)

    # Layer 2: h @ W2 + b2, ReLU (bf16 operands, f32 accumulate on the MXU).
    h = jnp.dot(h, w2_ref[...], preferred_element_type=jnp.float32)
    h = jnp.maximum(h + b2_ref[...], 0.0).astype(cd)

    # Output layer: h @ W3 + b3 -> [TB, 1] f32.
    q = jnp.dot(h, w3_ref[...], preferred_element_type=jnp.float32) + b3_ref[...]
    o_ref[...] = q.astype(o_ref.dtype)


def prepare_params(params, state_sizes, compute_dtype=jnp.bfloat16):
    """One-time glue, hoisted out of the hot path.

    Splits W1 into obs/act halves, lifts biases to [1, H] rows, and casts the
    weights to the MXU compute dtype.  Weights are stored [in, out] (transposed
    vs. PyTorch nn.Linear's [out, in]); transpose real checkpoints before use.
    """
    S = state_sizes
    cd = compute_dtype
    w1 = jnp.asarray(params["w1"])
    return (
        jnp.asarray(w1[:S, :], cd),                              # w1o  [S,  H1]
        jnp.asarray(w1[S:, :], cd),                              # w1a  [A,  H1]
        jnp.asarray(params["b1"], jnp.float32).reshape(1, -1),   # b1   [1,  H1]
        jnp.asarray(params["w2"], cd),                           # w2   [H1, H2]
        jnp.asarray(params["b2"], jnp.float32).reshape(1, -1),   # b2   [1,  H2]
        jnp.asarray(params["w3"], cd),                           # w3   [H2, 1]
        jnp.asarray(params["b3"], jnp.float32).reshape(1, -1),   # b3   [1,  1]
    )


@functools.partial(jax.jit, static_argnames=("block_batch",))
def nn_q_function(obs, act, prepared_params, block_batch=None):
    """Pallas-backed forward of NNQFunction.

    obs: [B, S], act: [B, A]; prepared_params from prepare_params().
    Returns q: [B, 1] float32.
    """
    w1o, w1a, b1, w2, b2, w3, b3 = prepared_params

    # Inputs stream in their native float dtype (no wrapper cast / no pad:
    # both would be an extra full HBM pass over the dominant stream).
    obs = jnp.asarray(obs)
    act = jnp.asarray(act)
    if obs.dtype not in (jnp.bfloat16, jnp.float32):
        obs = obs.astype(jnp.float32)
    if act.dtype not in (jnp.bfloat16, jnp.float32):
        act = act.astype(jnp.float32)

    B, S = obs.shape
    _, A = act.shape
    H1 = w1o.shape[1]
    H2 = w2.shape[1]

    # Lane-padded per-row VMEM bytes of the double-buffered streamed blocks
    # (obs + act inputs and the [tb, 1] f32 output, each padded to 128 lanes).
    row_bytes = (_round_up(S, _LANE) * obs.dtype.itemsize
                 + _round_up(A, _LANE) * act.dtype.itemsize
                 + _LANE * 4)
    padded_row_bytes = 2 * row_bytes                 # double-buffered
    vmem_budget = int(_VMEM_LIMIT_BYTES * 0.6)       # headroom for weights/spills

    bb = _DEFAULT_BLOCK_BATCH if block_batch is None else block_batch
    tb = _pick_batch_tile(B, bb, vmem_budget, padded_row_bytes)
    grid = (pl.cdiv(B, tb),)                         # ragged last tile is fine:
                                                     # edge rows are never written back

    stream = lambda cols: pl.BlockSpec((tb, cols), lambda i: (i, 0))
    # Constant block index -> weights/biases fetched once, stay VMEM-resident.
    resident = lambda shape: pl.BlockSpec(shape, lambda i: (0, 0))

    in_specs = [
        stream(S),               # obs  (streamed, double-buffered)
        stream(A),               # act  (streamed, double-buffered)
        resident(w1o.shape),
        resident(w1a.shape),
        resident(b1.shape),
        resident(w2.shape),
        resident(b2.shape),
        resident(w3.shape),
        resident(b3.shape),
    ]
    out_spec = pl.BlockSpec((tb, 1), lambda i: (i, 0))

    flops = 2 * B * ((S + A) * H1 + H1 * H2 + H2 * 1)
    bytes_accessed = (
        obs.size * obs.dtype.itemsize + act.size * act.dtype.itemsize + B * 4
        + sum(int(p.size) * p.dtype.itemsize for p in prepared_params))

    q = pl.pallas_call(
        _qfunc_kernel,
        out_shape=jax.ShapeDtypeStruct((B, 1), jnp.float32),
        grid=grid,
        in_specs=in_specs,
        out_specs=out_spec,
        compiler_params=pltpu.CompilerParams(
            dimension_semantics=("parallel",),       # v7x: shard batch over both TCs
            vmem_limit_bytes=_VMEM_LIMIT_BYTES,
        ),
        cost_estimate=pl.CostEstimate(
            flops=flops, transcendentals=0, bytes_accessed=bytes_accessed),
    )(obs, act, w1o, w1a, b1, w2, b2, w3, b3)

    return q


def init_params(key, state_sizes, action_sizes, hidden_sizes):
    """Deterministic synthetic init; shapes match MLP(S+A -> hidden_sizes -> 1).

    Weights stored [in_features, out_features] (transposed vs. nn.Linear).
    """
    dims = [state_sizes + action_sizes] + list(hidden_sizes) + [1]
    keys = jax.random.split(key, 2 * (len(dims) - 1))
    params = {}
    for i, (din, dout) in enumerate(zip(dims[:-1], dims[1:])):
        scale = 1.0 / jnp.sqrt(jnp.float32(din))
        params[f"w{i + 1}"] = scale * jax.random.normal(keys[2 * i], (din, dout), jnp.float32)
        params[f"b{i + 1}"] = scale * jax.random.normal(keys[2 * i + 1], (dout,), jnp.float32)
    return params


def _reference(obs, act, params, compute_dtype=jnp.bfloat16):
    """Pure-JAX reference mimicking the kernel's bf16 quantization (f32 accumulate)."""
    f32 = jnp.float32
    q = lambda x: jnp.asarray(x).astype(compute_dtype).astype(f32)
    x = jnp.concatenate([q(obs), q(act)], axis=1)
    h = q(jnp.maximum(x @ q(params["w1"]) + params["b1"], 0.0))
    h = q(jnp.maximum(h @ q(params["w2"]) + params["b2"], 0.0))
    return h @ q(params["w3"]) + params["b3"]


if __name__ == "__main__":
    S, A = 24, 8
    hidden_sizes = (32, 32)

    key = jax.random.PRNGKey(0)
    k_obs, k_act, k_par, k_obs2, k_act2, k_obs3, k_act3 = jax.random.split(key, 7)

    params = init_params(k_par, S, A, hidden_sizes)
    prepared = prepare_params(params, S)   # hoisted glue: W1 split, bias rows, bf16 cast

    # Case 1: tiny batch -> single grid step, block equals the full batch.
    obs = jax.random.normal(k_obs, (8, S), jnp.float32)
    act = jax.random.normal(k_act, (8, A), jnp.float32)
    q = jax.block_until_ready(nn_q_function(obs, act, prepared))
    q_ref = _reference(obs, act, params)
    assert q.shape == (8, 1)
    assert jnp.allclose(q, q_ref, atol=1e-2, rtol=1e-2), "mismatch vs reference (B=8)"

    # Case 2: batch not a multiple of the tile -> exercises the ragged edge
    # block (no wrapper padding) on a multi-step pipelined grid.
    obs2 = jax.random.normal(k_obs2, (50, S), jnp.float32)
    act2 = jax.random.normal(k_act2, (50, A), jnp.float32)
    q2 = jax.block_until_ready(nn_q_function(obs2, act2, prepared, block_batch=16))
    q2_ref = _reference(obs2, act2, params)
    assert q2.shape == (50, 1)
    assert jnp.allclose(q2, q2_ref, atol=1e-2, rtol=1e-2), "mismatch vs reference (B=50)"

    # Case 3: default tile selection path (tile capped for >=2 grid steps),
    # ragged last block again.
    obs3 = jax.random.normal(k_obs3, (300, S), jnp.float32)
    act3 = jax.random.normal(k_act3, (300, A), jnp.float32)
    q3 = jax.block_until_ready(nn_q_function(obs3, act3, prepared))
    q3_ref = _reference(obs3, act3, params)
    assert q3.shape == (300, 1)
    assert jnp.allclose(q3, q3_ref, atol=1e-2, rtol=1e-2), "mismatch vs reference (B=300)"

    print("KERNEL_OK")
</pallas_src>

<mosaic_0001>
module attributes {stable_mosaic.version = 11 : i64} {
  func.func @_qfunc_kernel(%arg0: i32, %arg1: memref<8x24xf32, #tpu.memory_space<vmem>>, %arg2: memref<8x8xf32, #tpu.memory_space<vmem>>, %arg3: memref<24x32xbf16, #tpu.memory_space<vmem>>, %arg4: memref<8x32xbf16, #tpu.memory_space<vmem>>, %arg5: memref<1x32xf32, #tpu.memory_space<vmem>>, %arg6: memref<32x32xbf16, #tpu.memory_space<vmem>>, %arg7: memref<1x32xf32, #tpu.memory_space<vmem>>, %arg8: memref<32x1xbf16, #tpu.memory_space<vmem>>, %arg9: memref<1x1xf32, #tpu.memory_space<vmem>>, %arg10: memref<8x1xf32, #tpu.memory_space<vmem>>) attributes {dimension_semantics = [#tpu.dimension_semantics<parallel>], iteration_bounds = array<i64: 1>, scalar_prefetch = 0 : i64, scratch_operands = 0 : i64, tpu.core_type = #tpu.core_type<tc>, window_params = [{transform_indices = @transform_0, window_bounds = array<i64: 8, 24>}, {transform_indices = @transform_1, window_bounds = array<i64: 8, 8>}, {pipeline_mode = #tpu.pipeline_mode<synchronous>, transform_indices = @transform_2, window_bounds = array<i64: 24, 32>}, {pipeline_mode = #tpu.pipeline_mode<synchronous>, transform_indices = @transform_3, window_bounds = array<i64: 8, 32>}, {pipeline_mode = #tpu.pipeline_mode<synchronous>, transform_indices = @transform_4, window_bounds = array<i64: 1, 32>}, {pipeline_mode = #tpu.pipeline_mode<synchronous>, transform_indices = @transform_5, window_bounds = array<i64: 32, 32>}, {pipeline_mode = #tpu.pipeline_mode<synchronous>, transform_indices = @transform_6, window_bounds = array<i64: 1, 32>}, {pipeline_mode = #tpu.pipeline_mode<synchronous>, transform_indices = @transform_7, window_bounds = array<i64: 32, 1>}, {pipeline_mode = #tpu.pipeline_mode<synchronous>, transform_indices = @transform_8, window_bounds = array<i64: 1, 1>}, {transform_indices = @transform_9, window_bounds = array<i64: 8, 1>}]} {
    %c0 = arith.constant 0 : index
    %c0_0 = arith.constant 0 : index
    %0 = vector.load %arg1[%c0, %c0_0] : memref<8x24xf32, #tpu.memory_space<vmem>>, vector<8x24xf32>
    %1 = arith.truncf %0 : vector<8x24xf32> to vector<8x24xbf16>
    %c0_1 = arith.constant 0 : index
    %c0_2 = arith.constant 0 : index
    %2 = vector.load %arg2[%c0_1, %c0_2] : memref<8x8xf32, #tpu.memory_space<vmem>>, vector<8x8xf32>
    %3 = arith.truncf %2 : vector<8x8xf32> to vector<8x8xbf16>
    %c0_3 = arith.constant 0 : index
    %c0_4 = arith.constant 0 : index
    %4 = vector.load %arg3[%c0_3, %c0_4] : memref<24x32xbf16, #tpu.memory_space<vmem>>, vector<24x32xbf16>
    %cst = arith.constant dense<0.000000e+00> : vector<8x32xf32>
    %5 = tpu.matmul %1, %4, %cst {dimension_numbers = #tpu.dot_dimension_numbers<[1], [0], [0], [1], [0, 0, 1, 1], [], []>} : vector<8x24xbf16>, vector<24x32xbf16>, vector<8x32xf32> -> vector<8x32xf32>
    %c0_5 = arith.constant 0 : index
    %c0_6 = arith.constant 0 : index
    %6 = vector.load %arg4[%c0_5, %c0_6] : memref<8x32xbf16, #tpu.memory_space<vmem>>, vector<8x32xbf16>
    %cst_7 = arith.constant dense<0.000000e+00> : vector<8x32xf32>
    %7 = tpu.matmul %3, %6, %cst_7 {dimension_numbers = #tpu.dot_dimension_numbers<[1], [0], [0], [1], [0, 0, 1, 1], [], []>} : vector<8x8xbf16>, vector<8x32xbf16>, vector<8x32xf32> -> vector<8x32xf32>
    %8 = arith.addf %5, %7 : vector<8x32xf32>
    %c0_8 = arith.constant 0 : index
    %c0_9 = arith.constant 0 : index
    %9 = vector.load %arg5[%c0_8, %c0_9] : memref<1x32xf32, #tpu.memory_space<vmem>>, vector<1x32xf32>
    %10 = vector.broadcast %9 : vector<1x32xf32> to vector<8x32xf32>
    %11 = arith.addf %8, %10 : vector<8x32xf32>
    %cst_10 = arith.constant 0.000000e+00 : f32
    %12 = vector.broadcast %cst_10 : f32 to vector<8x32xf32>
    %13 = arith.maximumf %11, %12 : vector<8x32xf32>
    %14 = arith.truncf %13 : vector<8x32xf32> to vector<8x32xbf16>
    %c0_11 = arith.constant 0 : index
    %c0_12 = arith.constant 0 : index
    %15 = vector.load %arg6[%c0_11, %c0_12] : memref<32x32xbf16, #tpu.memory_space<vmem>>, vector<32x32xbf16>
    %cst_13 = arith.constant dense<0.000000e+00> : vector<8x32xf32>
    %16 = tpu.matmul %14, %15, %cst_13 {dimension_numbers = #tpu.dot_dimension_numbers<[1], [0], [0], [1], [0, 0, 1, 1], [], []>} : vector<8x32xbf16>, vector<32x32xbf16>, vector<8x32xf32> -> vector<8x32xf32>
    %c0_14 = arith.constant 0 : index
    %c0_15 = arith.constant 0 : index
    %17 = vector.load %arg7[%c0_14, %c0_15] : memref<1x32xf32, #tpu.memory_space<vmem>>, vector<1x32xf32>
    %18 = vector.broadcast %17 : vector<1x32xf32> to vector<8x32xf32>
    %19 = arith.addf %16, %18 : vector<8x32xf32>
    %cst_16 = arith.constant 0.000000e+00 : f32
    %20 = vector.broadcast %cst_16 : f32 to vector<8x32xf32>
    %21 = arith.maximumf %19, %20 : vector<8x32xf32>
    %22 = arith.truncf %21 : vector<8x32xf32> to vector<8x32xbf16>
    %c0_17 = arith.constant 0 : index
    %c0_18 = arith.constant 0 : index
    %23 = vector.load %arg8[%c0_17, %c0_18] : memref<32x1xbf16, #tpu.memory_space<vmem>>, vector<32x1xbf16>
    %cst_19 = arith.constant dense<0.000000e+00> : vector<8x1xf32>
    %24 = tpu.matmul %22, %23, %cst_19 {dimension_numbers = #tpu.dot_dimension_numbers<[1], [0], [0], [1], [0, 0, 1, 1], [], []>} : vector<8x32xbf16>, vector<32x1xbf16>, vector<8x1xf32> -> vector<8x1xf32>
    %c0_20 = arith.constant 0 : index
    %c0_21 = arith.constant 0 : index
    %25 = vector.load %arg9[%c0_20, %c0_21] : memref<1x1xf32, #tpu.memory_space<vmem>>, vector<1x1xf32>
    %26 = vector.broadcast %25 : vector<1x1xf32> to vector<8x1xf32>
    %27 = arith.addf %24, %26 : vector<8x1xf32>
    %c0_22 = arith.constant 0 : index
    %c0_23 = arith.constant 0 : index
    %28 = vector.load %arg10[%c0_22, %c0_23] : memref<8x1xf32, #tpu.memory_space<vmem>>, vector<8x1xf32>
    tpu.vector_store %arg10[%c0_22, %c0_23], %27 {strides = array<i32>} : memref<8x1xf32, #tpu.memory_space<vmem>>, vector<8x1xf32>,
    return
  }
  func.func @transform_0(%arg0: i32) -> (i32, i32) {
    %c0_i32 = arith.constant 0 : i32
    %c0_i32_0 = arith.constant 0 : i32
    return %arg0, %c0_i32 : i32, i32
  }
  func.func @transform_1(%arg0: i32) -> (i32, i32) {
    %c0_i32 = arith.constant 0 : i32
    %c0_i32_0 = arith.constant 0 : i32
    return %arg0, %c0_i32 : i32, i32
  }
  func.func @transform_2(%arg0: i32) -> (i32, i32) {
    %c0_i32 = arith.constant 0 : i32
    %c0_i32_0 = arith.constant 0 : i32
    %c0_i32_1 = arith.constant 0 : i32
    return %c0_i32, %c0_i32_0 : i32, i32
  }
  func.func @transform_3(%arg0: i32) -> (i32, i32) {
    %c0_i32 = arith.constant 0 : i32
    %c0_i32_0 = arith.constant 0 : i32
    %c0_i32_1 = arith.constant 0 : i32
    return %c0_i32, %c0_i32_0 : i32, i32
  }
  func.func @transform_4(%arg0: i32) -> (i32, i32) {
    %c0_i32 = arith.constant 0 : i32
    %c0_i32_0 = arith.constant 0 : i32
    %c0_i32_1 = arith.constant 0 : i32
    return %c0_i32, %c0_i32_0 : i32, i32
  }
  func.func @transform_5(%arg0: i32) -> (i32, i32) {
    %c0_i32 = arith.constant 0 : i32
    %c0_i32_0 = arith.constant 0 : i32
    %c0_i32_1 = arith.constant 0 : i32
    return %c0_i32, %c0_i32_0 : i32, i32
  }
  func.func @transform_6(%arg0: i32) -> (i32, i32) {
    %c0_i32 = arith.constant 0 : i32
    %c0_i32_0 = arith.constant 0 : i32
    %c0_i32_1 = arith.constant 0 : i32
    return %c0_i32, %c0_i32_0 : i32, i32
  }
  func.func @transform_7(%arg0: i32) -> (i32, i32) {
    %c0_i32 = arith.constant 0 : i32
    %c0_i32_0 = arith.constant 0 : i32
    %c0_i32_1 = arith.constant 0 : i32
    return %c0_i32, %c0_i32_0 : i32, i32
  }
  func.func @transform_8(%arg0: i32) -> (i32, i32) {
    %c0_i32 = arith.constant 0 : i32
    %c0_i32_0 = arith.constant 0 : i32
    %c0_i32_1 = arith.constant 0 : i32
    return %c0_i32, %c0_i32_0 : i32, i32
  }
  func.func @transform_9(%arg0: i32) -> (i32, i32) {
    %c0_i32 = arith.constant 0 : i32
    %c0_i32_0 = arith.constant 0 : i32
    return %arg0, %c0_i32 : i32, i32
  }
}

</mosaic_0001>

<llo_original>
// kernel: nn_q_function.1
$region0: #{nn_q_function.1}
  #allocation0 [shape = 'u32[]', space=smem, size = 0x4, offset = 0x4, fixed_abs, tag = 'smem constant byte address 0x4 - core index']
  #allocation1 [shape = 'u32[144,128]{1,0:T(1,128)}', space=vmem, size = 0x12000, scoped, tag = 'internal scratch']
  #allocation2 [shape = 'f32[1,1]{1,0:T(1,128)S(1)}', space=vmem, size = 0x200, scoped, tag = 'scoped memory for nn_q_function.1']
  %s0 = inlined_call_operand.hbm [shape: f32[8,24], index: 0, kind: input, shape index: {}]
  %s1 = inlined_call_operand.hbm [shape: f32[8,8], index: 1, kind: input, shape index: {}]
  %s2 = inlined_call_operand.vmem [shape: bf16[24,32], index: 2, kind: input, shape index: {}]
  %s3 = inlined_call_operand.vmem [shape: bf16[8,32], index: 3, kind: input, shape index: {}]
  %s4 = inlined_call_operand.vmem [shape: f32[1,32], index: 4, kind: input, shape index: {}]
  %s5 = inlined_call_operand.vmem [shape: bf16[32,32], index: 5, kind: input, shape index: {}]
  %s6 = inlined_call_operand.vmem [shape: f32[1,32], index: 6, kind: input, shape index: {}]
  %s7 = inlined_call_operand.vmem [shape: bf16[32,1], index: 7, kind: input, shape index: {}]
  %s8 = inlined_call_operand.<no memory space> [shape: f32[1,1], index: 8, kind: input, shape index: {}]
  %s9 = inlined_call_operand.vmem [shape: f32[8,1], index: 9, kind: output, shape index: {}]
  %s10 = sld [smem:[#allocation0]]
  $region54: #{nn_q_function.1} parent=0
    _
  %s12 = ssub.s32 1, %s10
  %s13 = scalar_select 0, %s12, %s10
  %v14 = vstv %s8
  %15 = vst [vmem:[#allocation2] sm:$0x1] %v14
  $region1: #{nn_q_function.1} parent=0
    #allocation3 [shape = 'u8[4096]{0}', space=vmem, size = 0x1000, scoped, tag = 'input window, operand 0, single buffered']
    #allocation4 [shape = 's32[1]{0}', space=sflag, size = 0x4, scoped, tag = 'scoped memory for nn_q_function.1']
    #allocation5 [shape = 'u8[4096]{0}', space=vmem, size = 0x1000, scoped, tag = 'input window, operand 1, single buffered']
    #allocation6 [shape = 's32[1]{0}', space=sflag, size = 0x4, scoped, tag = 'scoped memory for nn_q_function.1']
    %16 = vsyncpa [#allocation4], 0
    %17 = vsyncpa [#allocation6], 0
    // Predicated region
    $region2: #{nn_q_function.1} parent=1 // pred_check
      _
    $region3: #{nn_q_function.1} parent=1 // pred_check_branch
      %19 = sbr.rel (0) target = $region5
    $region4: #{nn_q_function.1} parent=1 // pred_region
      %s21 = ssub.s32 128, 128
      %22 = vsyncadd [#allocation4], %s21
      %s24 = sshll.u32 [#allocation3], 4
      %s25 = int_to_ptr.vmem [resolvable:$true] %s24
      %27 = dma.hbm_to_vmem [thread:$0]  %s0, 128, %s25, [#allocation4]
    $region5: #{nn_q_function.1} parent=1 // pred_fallthru
      _
    // Predicated region
    $region6: #{nn_q_function.1} parent=1 // pred_check
      _
    $region7: #{nn_q_function.1} parent=1 // pred_check_branch
      %29 = sbr.rel (0) target = $region9
    $region8: #{nn_q_function.1} parent=1 // pred_region
      %s31 = ssub.s32 128, 128
      %32 = vsyncadd [#allocation6], %s31
      %s34 = sshll.u32 [#allocation5], 4
      %s35 = int_to_ptr.vmem [resolvable:$true] %s34
      %37 = dma.hbm_to_vmem [thread:$0]  %s1, 128, %s35, [#allocation6]
    $region9: #{nn_q_function.1} parent=1 // pred_fallthru
      _
    // Predicated region
    $region10: #{nn_q_function.1} parent=1 // pred_check
      _
    $region11: #{nn_q_function.1} parent=1 // pred_check_branch
      %39 = sbr.rel (0) target = $region13
    $region12: #{nn_q_function.1} parent=1 // pred_region
      _
    $region13: #{nn_q_function.1} parent=1 // pred_fallthru
      _
    // Predicated region
    $region14: #{nn_q_function.1} parent=1 // pred_check
      _
    $region15: #{nn_q_function.1} parent=1 // pred_check_branch
      %41 = sbr.rel (0) target = $region17
    $region16: #{nn_q_function.1} parent=1 // pred_region
      _
    $region17: #{nn_q_function.1} parent=1 // pred_fallthru
      _
    // Predicated region
    $region18: #{nn_q_function.1} parent=1 // pred_check
      _
    $region19: #{nn_q_function.1} parent=1 // pred_check_branch
      %43 = sbr.rel (0) target = $region21
    $region20: #{nn_q_function.1} parent=1 // pred_region
      _
    $region21: #{nn_q_function.1} parent=1 // pred_fallthru
      _
    // Predicated region
    $region22: #{nn_q_function.1} parent=1 // pred_check
      _
    $region23: #{nn_q_function.1} parent=1 // pred_check_branch
      %45 = sbr.rel (0) target = $region25
    $region24: #{nn_q_function.1} parent=1 // pred_region
      _
    $region25: #{nn_q_function.1} parent=1 // pred_fallthru
      _
    // Predicated region
    $region26: #{nn_q_function.1} parent=1 // pred_check
      _
    $region27: #{nn_q_function.1} parent=1 // pred_check_branch
      %47 = sbr.rel (0) target = $region29
    $region28: #{nn_q_function.1} parent=1 // pred_region
      _
    $region29: #{nn_q_function.1} parent=1 // pred_fallthru
      _
    // Predicated region
    $region30: #{nn_q_function.1} parent=1 // pred_check
      _
    $region31: #{nn_q_function.1} parent=1 // pred_check_branch
      %49 = sbr.rel (0) target = $region33
    $region32: #{nn_q_function.1} parent=1 // pred_region
      _
    $region33: #{nn_q_function.1} parent=1 // pred_fallthru
      _
    // Predicated region
    $region34: #{nn_q_function.1} parent=1 // pred_check
      _
    $region35: #{nn_q_function.1} parent=1 // pred_check_branch
      %51 = sbr.rel (0) target = $region37
    $region36: #{nn_q_function.1} parent=1 // pred_region
      _
    $region37: #{nn_q_function.1} parent=1 // pred_fallthru
      _
    // Predicated region
    $region38: #{nn_q_function.1} parent=1 // pred_check
      _
    $region39: #{nn_q_function.1} parent=1 // pred_check_branch
      %53 = sbr.rel (0) target = $region41
    $region40: #{nn_q_function.1} parent=1 // pred_region
      %54 = dma.done [#allocation4], 128
    $region41: #{nn_q_function.1} parent=1 // pred_fallthru
      _
    // Predicated region
    $region42: #{nn_q_function.1} parent=1 // pred_check
      _
    $region43: #{nn_q_function.1} parent=1 // pred_check_branch
      %56 = sbr.rel (0) target = $region45
    $region44: #{nn_q_function.1} parent=1 // pred_region
      %57 = dma.done [#allocation6], 128
    $region45: #{nn_q_function.1} parent=1 // pred_fallthru
      _
    %v59 = vld [vmem:[#allocation3] sm:$0xff]
    %v60 = vpack.c.bf16 %v59, %v59
    %v61 = vld [vmem:[#allocation5] sm:$0xff]
    %v62 = vpack.c.bf16 %v61, %v61
    %v63 = vld [vmem:[%s2] sm:$0xf]
    %v64 = vld [vmem:[%s2 + $0x4] sm:$0xf]
    %v65 = vld [vmem:[%s2 + $0x8] sm:$0xf]
    %v66 = vld [vmem:[%s3] sm:$0xf]
    %vm67 = vcmask 64512
    %v69 = vsel %vm67, %v62, 0
    %vm71 = vcmask 1043456
    %v73 = vsel %vm71, %v66, 0
    %75 = vmatprep.subr.bf16.mxu0 0
    %76 = vmatpush1.bf16.msra.mxu0 %v73
    %77 = vmatprep.subr.bf16.mxu0 0
    %78 = vmatpush1.bf16.msra.mxu0 0
    %79 = vmatprep.subr.bf16.mxu0 0
    %80 = vmatpush1.bf16.msra.mxu0 0
    %81 = vmatprep.subr.bf16.mxu0 0
    %82 = vmatpush1.bf16.msra.mxu0 0
    %83 = vmatprep.subr.bf16.mxu0 0
    %84 = vmatpush1.bf16.msra.mxu0 0
    %85 = vmatprep.subr.bf16.mxu0 0
    %86 = vmatpush1.bf16.msra.mxu0 0
    %87 = vmatprep.subr.bf16.mxu0 0
    %88 = vmatpush1.bf16.msra.mxu0 0
    %89 = vmatprep.subr.bf16.mxu0 0
    %90 = vmatpush1.bf16.msra.mxu0 0
    %91 = vmatprep.subr.bf16.mxu0 0
    %92 = vmatpush1.bf16.msra.mxu0 0
    %93 = vmatprep.subr.bf16.mxu0 0
    %94 = vmatpush1.bf16.msra.mxu0 0
    %95 = vmatprep.subr.bf16.mxu0 0
    %96 = vmatpush1.bf16.msra.mxu0 0
    %97 = vmatprep.subr.bf16.mxu0 0
    %98 = vmatpush1.bf16.msra.mxu0 0
    %99 = vmatprep.subr.bf16.mxu0 0
    %100 = vmatpush1.bf16.msra.mxu0 0
    %101 = vmatprep.subr.bf16.mxu0 0
    %102 = vmatpush1.bf16.msra.mxu0 0
    %103 = vmatprep.subr.bf16.mxu0 0
    %104 = vmatpush1.bf16.msra.mxu0 0
    %105 = vmatprep.subr.bf16.mxu0 0
    %106 = vmatpush1.bf16.msra.mxu0 0
    %107 = vmatprep.mubr.bf16.mxu0 0
    %108 = vmatmul.mubr.bf16.gmra.mrb[0].mxu0 %v69
    %v109 = vpop.f32.mrb[0].mxu0
    %v110 = vadd.f32 0.0, %v109
    %v111 = vpop.f32.mrb[0].mxu0
    %v112 = vpop.f32.mrb[0].mxu0
    %v113 = vpop.f32.mrb[0].mxu0
    %114 = vdwg.mxu0
    %v118 = vunpack.c.l.b16 %v63
    %v119 = vunpack.c.l.b16 %v64
    %v120 = vunpack.c.l.b16 %v65
    %v121 = vpack.c.b16 %v119, %v118
    %v122 = vpack.c.b16 %v120, %v120
    %vm124 = vcmask 195584
    %v126 = vsel %vm124, %v60, 0
    %v129 = vsel %vm71, %v122, 0
    %131 = vmatprep.subr.bf16.mxu0 0
    %132 = vmatpush1.bf16.msra.mxu0 %v121
    %133 = vmatprep.subr.bf16.mxu0 0
    %134 = vmatpush1.bf16.msra.mxu0 %v129
    %135 = vmatprep.subr.bf16.mxu0 0
    %136 = vmatpush1.bf16.msra.mxu0 0
    %137 = vmatprep.subr.bf16.mxu0 0
    %138 = vmatpush1.bf16.msra.mxu0 0
    %139 = vmatprep.subr.bf16.mxu0 0
    %140 = vmatpush1.bf16.msra.mxu0 0
    %141 = vmatprep.subr.bf16.mxu0 0
    %142 = vmatpush1.bf16.msra.mxu0 0
    %143 = vmatprep.subr.bf16.mxu0 0
    %144 = vmatpush1.bf16.msra.mxu0 0
    %145 = vmatprep.subr.bf16.mxu0 0
    %146 = vmatpush1.bf16.msra.mxu0 0
    %147 = vmatprep.subr.bf16.mxu0 0
    %148 = vmatpush1.bf16.msra.mxu0 0
    %149 = vmatprep.subr.bf16.mxu0 0
    %150 = vmatpush1.bf16.msra.mxu0 0
    %151 = vmatprep.subr.bf16.mxu0 0
    %152 = vmatpush1.bf16.msra.mxu0 0
    %153 = vmatprep.subr.bf16.mxu0 0
    %154 = vmatpush1.bf16.msra.mxu0 0
    %155 = vmatprep.subr.bf16.mxu0 0
    %156 = vmatpush1.bf16.msra.mxu0 0
    %157 = vmatprep.subr.bf16.mxu0 0
    %158 = vmatpush1.bf16.msra.mxu0 0
    %159 = vmatprep.subr.bf16.mxu0 0
    %160 = vmatpush1.bf16.msra.mxu0 0
    %161 = vmatprep.subr.bf16.mxu0 0
    %162 = vmatpush1.bf16.msra.mxu0 0
    %163 = vmatprep.mubr.bf16.mxu0 0
    %164 = vmatmul.mubr.bf16.gmra.mrb[0].mxu0 %v126
    %v165 = vpop.f32.mrb[0].mxu0
    %v166 = vadd.f32 %v110, %v165
    %v167 = vpop.f32.mrb[0].mxu0
    %v168 = vpop.f32.mrb[0].mxu0
    %v169 = vpop.f32.mrb[0].mxu0
    %170 = vdwg.mxu0
    %v171 = vld [vmem:[%s4] sm:$0x1]
    %v173 = vlaneseq
    %v174 = vshrl.u32 %v173, 7
    %v175 = vsub.s32 0, %v174
    %v176 = vrot.slane %v171, %v175
    %v178 = vadd.f32 %v166, %v176
    %v179 = vmax.f32 %v178, 0.0
    %v180 = vpack.c.bf16 %v179, %v179
    %v181 = vld [vmem:[%s5] sm:$0xf]
    %v182 = vld [vmem:[%s5 + $0x4] sm:$0xf]
    %v183 = vld [vmem:[%s5 + $0x8] sm:$0xf]
    %v184 = vld [vmem:[%s5 + $0xc] sm:$0xf]
    %v185 = vld [vmem:[%s6] sm:$0x1]
    %v187 = vlaneseq
    %v188 = vshrl.u32 %v187, 7
    %v189 = vsub.s32 0, %v188
    %v190 = vrot.slane %v185, %v189
    %v196 = vunpack.c.l.b16 %v181
    %v197 = vunpack.c.l.b16 %v182
    %v198 = vunpack.c.l.b16 %v183
    %v199 = vunpack.c.l.b16 %v184
    %v200 = vpack.c.b16 %v197, %v196
    %v201 = vpack.c.b16 %v199, %v198
    %vm204 = vcmask 261120
    %v206 = vsel %vm204, %v180, 0
    %208 = vmatprep.subr.bf16.mxu0 0
    %209 = vmatpush1.bf16.msra.mxu0 %v200
    %210 = vmatprep.subr.bf16.mxu0 0
    %211 = vmatpush1.bf16.msra.mxu0 %v201
    %212 = vmatprep.subr.bf16.mxu0 0
    %213 = vmatpush1.bf16.msra.mxu0 0
    %214 = vmatprep.subr.bf16.mxu0 0
    %215 = vmatpush1.bf16.msra.mxu0 0
    %216 = vmatprep.subr.bf16.mxu0 0
    %217 = vmatpush1.bf16.msra.mxu0 0
    %218 = vmatprep.subr.bf16.mxu0 0
    %219 = vmatpush1.bf16.msra.mxu0 0
    %220 = vmatprep.subr.bf16.mxu0 0
    %221 = vmatpush1.bf16.msra.mxu0 0
    %222 = vmatprep.subr.bf16.mxu0 0
    %223 = vmatpush1.bf16.msra.mxu0 0
    %224 = vmatprep.subr.bf16.mxu0 0
    %225 = vmatpush1.bf16.msra.mxu0 0
    %226 = vmatprep.subr.bf16.mxu0 0
    %227 = vmatpush1.bf16.msra.mxu0 0
    %228 = vmatprep.subr.bf16.mxu0 0
    %229 = vmatpush1.bf16.msra.mxu0 0
    %230 = vmatprep.subr.bf16.mxu0 0
    %231 = vmatpush1.bf16.msra.mxu0 0
    %232 = vmatprep.subr.bf16.mxu0 0
    %233 = vmatpush1.bf16.msra.mxu0 0
    %234 = vmatprep.subr.bf16.mxu0 0
    %235 = vmatpush1.bf16.msra.mxu0 0
    %236 = vmatprep.subr.bf16.mxu0 0
    %237 = vmatpush1.bf16.msra.mxu0 0
    %238 = vmatprep.subr.bf16.mxu0 0
    %239 = vmatpush1.bf16.msra.mxu0 0
    %240 = vmatprep.mubr.bf16.mxu0 0
    %241 = vmatmul.mubr.bf16.gmra.mrb[0].mxu0 %v206
    %v242 = vpop.f32.mrb[0].mxu0
    %v243 = vadd.f32 %v190, %v242
    %v244 = vpop.f32.mrb[0].mxu0
    %v245 = vpop.f32.mrb[0].mxu0
    %v246 = vpop.f32.mrb[0].mxu0
    %247 = vdwg.mxu0
    %v248 = vmax.f32 %v243, 0.0
    %v249 = vpack.c.bf16 %v248, %v248
    %v250 = vld [vmem:[%s7] sm:$0xf]
    %v251 = vld [vmem:[%s7 + $0x4] sm:$0xf]
    %v252 = vld [vmem:[%s7 + $0x8] sm:$0xf]
    %v253 = vld [vmem:[%s7 + $0xc] sm:$0xf]
    %v254 = vld [vmem:[#allocation2] sm:$0x1]
    %v256 = vlaneseq
    %v257 = vshrl.u32 %v256, 7
    %v258 = vsub.s32 0, %v257
    %v259 = vrot.slane %v254, %v258
    %v265 = vunpack.c.l.b16 %v250
    %v266 = vunpack.c.l.b16 %v251
    %v267 = vunpack.c.l.b16 %v252
    %v268 = vunpack.c.l.b16 %v253
    %v269 = vpack.c.b16 %v266, %v265
    %v270 = vpack.c.b16 %v268, %v267
    %v274 = vsel %vm204, %v249, 0
    %276 = vmatprep.subr.bf16.mxu0 0
    %277 = vmatpush1.bf16.msra.mxu0 %v269
    %278 = vmatprep.subr.bf16.mxu0 0
    %279 = vmatpush1.bf16.msra.mxu0 %v270
    %280 = vmatprep.subr.bf16.mxu0 0
    %281 = vmatpush1.bf16.msra.mxu0 0
    %282 = vmatprep.subr.bf16.mxu0 0
    %283 = vmatpush1.bf16.msra.mxu0 0
    %284 = vmatprep.subr.bf16.mxu0 0
    %285 = vmatpush1.bf16.msra.mxu0 0
    %286 = vmatprep.subr.bf16.mxu0 0
    %287 = vmatpush1.bf16.msra.mxu0 0
    %288 = vmatprep.subr.bf16.mxu0 0
    %289 = vmatpush1.bf16.msra.mxu0 0
    %290 = vmatprep.subr.bf16.mxu0 0
    %291 = vmatpush1.bf16.msra.mxu0 0
    %292 = vmatprep.subr.bf16.mxu0 0
    %293 = vmatpush1.bf16.msra.mxu0 0
    %294 = vmatprep.subr.bf16.mxu0 0
    %295 = vmatpush1.bf16.msra.mxu0 0
    %296 = vmatprep.subr.bf16.mxu0 0
    %297 = vmatpush1.bf16.msra.mxu0 0
    %298 = vmatprep.subr.bf16.mxu0 0
    %299 = vmatpush1.bf16.msra.mxu0 0
    %300 = vmatprep.subr.bf16.mxu0 0
    %301 = vmatpush1.bf16.msra.mxu0 0
    %302 = vmatprep.subr.bf16.mxu0 0
    %303 = vmatpush1.bf16.msra.mxu0 0
    %304 = vmatprep.subr.bf16.mxu0 0
    %305 = vmatpush1.bf16.msra.mxu0 0
    %306 = vmatprep.subr.bf16.mxu0 0
    %307 = vmatpush1.bf16.msra.mxu0 0
    %308 = vmatprep.mubr.bf16.mxu0 0
    %309 = vmatmul.mubr.bf16.gmra.mrb[0].mxu0 %v274
    %v310 = vpop.f32.mrb[0].mxu0
    %v311 = vadd.f32 %v259, %v310
    %v312 = vpop.f32.mrb[0].mxu0
    %v313 = vpop.f32.mrb[0].mxu0
    %v314 = vpop.f32.mrb[0].mxu0
    %315 = vdwg.mxu0
    %vm316 = vcmask 7168
    %317 = vst.msk [vmem:[%s9] sm:$0xff] %vm316, %v311
    // Predicated region
    $region46: #{nn_q_function.1} parent=1 // pred_check
      _
    $region47: #{nn_q_function.1} parent=1 // pred_check_branch
      %319 = sbr.rel (0) target = $region49
    $region48: #{nn_q_function.1} parent=1 // pred_region
      _
    $region49: #{nn_q_function.1} parent=1 // pred_fallthru
      _
    // Predicated region
    $region50: #{nn_q_function.1} parent=1 // pred_check
      _
    $region51: #{nn_q_function.1} parent=1 // pred_check_branch
      %321 = sbr.rel (0) target = $region53
    $region52: #{nn_q_function.1} parent=1 // pred_region
      _
    $region53: #{nn_q_function.1} parent=1 // pred_fallthru
      _
    %322 = vsyncpa [#allocation4], 1
    %323 = vsyncpa [#allocation6], 1

</llo_original>
